<compile_context>
chip_gen: v6e
topology: v6e:2x2x1
jax: 0.10.0
libtpu: 0.0.40
codegen_flags: <defaults>
</compile_context>

<pallas_src>
import functools
import math

import jax
import jax.numpy as jnp
from jax import lax
from jax.experimental import pallas as pl
from jax.experimental.pallas import tpu as pltpu

_SUBLANES = 8
_MAX_BLOCK_ROWS = 1024


def _num_tensorcores() -> int:
    """Best-effort TensorCore count; falls back to 1 (always correct)."""
    try:
        info = pltpu.get_tpu_info()
        for name in ("num_cores", "core_count", "num_tensorcores", "tensorcore_count"):
            v = getattr(info, name, None)
            if isinstance(v, int) and 1 <= v <= 16:
                return v
    except Exception:
        pass
    try:
        v = getattr(jax.devices()[0], "num_cores", None)
        if isinstance(v, int) and 1 <= v <= 16:
            return v
    except Exception:
        pass
    return 1


def _fscore_reduce_kernel(pr_ref, gt_ref, out_ref, *,
                          rows_per_block, sub, n_sub, r_valid,
                          threshold, logit_threshold):
    """Accumulate per-lane partial sums of gt*pr, pr, gt into the resident
    output block.

    pr_ref, gt_ref : (rows_per_block, lanes) input blocks (original dtype)
    out_ref        : (1, 3, sub, lanes) f32 resident accumulator block
    """
    c = pl.program_id(0)
    j = pl.program_id(1)
    steps = pl.num_programs(1)
    lanes = pr_ref.shape[-1]

    @pl.when(j == 0)
    def _():
        out_ref[...] = jnp.zeros(out_ref.shape, out_ref.dtype)

    row_start = (c * steps + j) * rows_per_block

    def _transform(logits, gt):
        """Returns (pr, gt*pr) in f32 for one sub-slice."""
        if logit_threshold is not None:
            # sigmoid(x) > t  <=>  x > logit(t)   (no EUP at all)
            hit = logits > logit_threshold
            pr = hit.astype(jnp.float32)
            prod = jnp.where(hit, gt, 0.0)
        else:
            # single EUP push per element (vs exp + reciprocal for sigmoid)
            pr = 0.5 * jnp.tanh(0.5 * logits) + 0.5
            if threshold is not None:
                # rare path: threshold outside (0, 1)
                hit = pr > threshold
                pr = hit.astype(jnp.float32)
                prod = jnp.where(hit, gt, 0.0)
            else:
                prod = gt * pr
        return pr, prod

    def _accumulate(masked):
        def body(i, carry):
            tp_c, sp_c, sg_c = carry
            off = pl.multiple_of(i * sub, sub)
            logits = pr_ref[pl.ds(off, sub), :].astype(jnp.float32)
            gt = gt_ref[pl.ds(off, sub), :].astype(jnp.float32)
            if masked:
                rows_left = r_valid - (row_start + i * sub)
                row_idx = lax.broadcasted_iota(jnp.int32, (sub, lanes), 0)
                valid = row_idx < rows_left
                # Mask inputs first so Pallas-padded garbage (possibly NaN)
                # never reaches the accumulators.
                logits = jnp.where(valid, logits, 0.0)
                gt = jnp.where(valid, gt, 0.0)
                pr, prod = _transform(logits, gt)
                pr = jnp.where(valid, pr, 0.0)
            else:
                pr, prod = _transform(logits, gt)
            return (tp_c + prod, sp_c + pr, sg_c + gt)

        zero = jnp.zeros((sub, lanes), jnp.float32)
        unroll = max(1, min(8, n_sub))
        tp_c, sp_c, sg_c = lax.fori_loop(0, n_sub, body, (zero, zero, zero),
                                         unroll=unroll)
        out_ref[0, 0] += tp_c
        out_ref[0, 1] += sp_c
        out_ref[0, 2] += sg_c

    is_full = row_start + rows_per_block <= r_valid

    @pl.when(is_full)
    def _():
        _accumulate(masked=False)

    @pl.when(jnp.logical_not(is_full))
    def _():
        _accumulate(masked=True)


def _pick_lanes(n):
    """Choose a lane width dividing n (no pad) or fall back to pad-to-128."""
    for lanes in (512, 256, 128):
        if n % lanes == 0:
            return lanes, 0
    lanes = 128
    return lanes, (-n) % lanes


def fscore_binary(logits, target, *, beta=1.0, eps=1e-7, threshold=None):
    """JAX/Pallas equivalent of Fscore_Binary.forward(input, target)."""
    n = int(logits.size)
    lanes, n_pad = _pick_lanes(n)

    thr = None if threshold is None else float(threshold)
    logit_thr = None
    if thr is not None and 0.0 < thr < 1.0:
        logit_thr = float(math.log(thr / (1.0 - thr)))
    if thr is None:
        pad_pr_contrib = 0.5                       # sigmoid(0)
    else:
        pad_pr_contrib = 1.0 if 0.5 > thr else 0.0

    pr_flat = logits.reshape(-1)
    gt_flat = target.reshape(-1)
    if n_pad:
        # TODO(synk): this fallback (numel not a multiple of 128) still pays a
        # full-copy jnp.pad of both inputs; the common image-metric sizes
        # (numel % 128 == 0) never hit it.
        pr_flat = jnp.pad(pr_flat, (0, n_pad))
        gt_flat = jnp.pad(gt_flat, (0, n_pad))

    r_total = (n + n_pad) // lanes
    pr2d = pr_flat.reshape(r_total, lanes)
    gt2d = gt_flat.reshape(r_total, lanes)

    if r_total >= _SUBLANES:
        rows_per_block = min(_MAX_BLOCK_ROWS, (r_total // _SUBLANES) * _SUBLANES)
        sub = _SUBLANES
    else:
        rows_per_block = r_total
        sub = r_total
    n_sub = rows_per_block // sub

    total_blocks = -(-r_total // rows_per_block)          # cdiv
    n_slices = 2 if (_num_tensorcores() >= 2 and total_blocks >= 8) else 1
    steps = -(-total_blocks // n_slices)
    last_block = total_blocks - 1

    kernel = functools.partial(
        _fscore_reduce_kernel,
        rows_per_block=rows_per_block, sub=sub, n_sub=n_sub, r_valid=r_total,
        threshold=thr, logit_threshold=logit_thr)

    # Clamp so over-allocated grid steps (slice rounding) re-read the last
    # block; the in-kernel mask zeroes their contribution.
    in_map = lambda c, j: (jnp.minimum(c * steps + j, last_block), 0)

    bytes_in = pr2d.size * pr2d.dtype.itemsize + gt2d.size * gt2d.dtype.itemsize
    bytes_out = n_slices * 3 * sub * lanes * 4
    cost = pl.CostEstimate(
        flops=6 * (n + n_pad),
        transcendentals=(0 if logit_thr is not None else (n + n_pad)),
        bytes_accessed=int(bytes_in + bytes_out))

    partials = pl.pallas_call(
        kernel,
        out_shape=jax.ShapeDtypeStruct((n_slices, 3, sub, lanes), jnp.float32),
        grid_spec=pltpu.PrefetchScalarGridSpec(
            num_scalar_prefetch=0,
            grid=(n_slices, steps),
            in_specs=[
                pl.BlockSpec((rows_per_block, lanes), in_map),
                pl.BlockSpec((rows_per_block, lanes), in_map),
            ],
            out_specs=pl.BlockSpec((1, 3, sub, lanes),
                                   lambda c, j: (c, 0, 0, 0)),
        ),
        compiler_params=pltpu.CompilerParams(
            dimension_semantics=("parallel", "arbitrary"),
            vmem_limit_bytes=32 * 1024 * 1024),
        cost_estimate=cost,
    )(pr2d, gt2d)

    # Tiny final reductions + scalar glue in plain JAX.
    tp = jnp.sum(partials[:, 0])
    sum_pr = jnp.sum(partials[:, 1]) - n_pad * pad_pr_contrib
    sum_gt = jnp.sum(partials[:, 2])

    fp = sum_pr - tp
    fn = sum_gt - tp
    b2 = beta ** 2
    return ((1.0 + b2) * tp + eps) / ((1.0 + b2) * tp + b2 * fn + fp + eps)


def _fscore_ref(logits, target, beta=1.0, eps=1e-7, threshold=None):
    """Pure-JAX reference mirroring the PyTorch code."""
    pr = jax.nn.sigmoid(logits.astype(jnp.float32))
    if threshold is not None:
        pr = (pr > threshold).astype(jnp.float32)
    gt = target.astype(jnp.float32)
    tp = jnp.sum(gt * pr)
    fp = jnp.sum(pr) - tp
    fn = jnp.sum(gt) - tp
    b2 = beta ** 2
    return ((1.0 + b2) * tp + eps) / ((1.0 + b2) * tp + b2 * fn + fp + eps)


if __name__ == "__main__":
    key = jax.random.PRNGKey(0)
    k1, k2, k3, k4, k5, k6 = jax.random.split(key, 6)

    # Small NCHW-like shapes consistent with a binary segmentation metric.
    B, C, H, W = 2, 4, 16, 16
    logits = jax.random.normal(k1, (B, C, H, W), dtype=jnp.float32)
    target = (jax.random.uniform(k2, (B, C, H, W)) > 0.5).astype(jnp.float32)

    # Sigmoid (tanh-form) path.
    score = jax.block_until_ready(fscore_binary(logits, target, threshold=None))
    ref = _fscore_ref(logits, target, threshold=None)
    assert jnp.allclose(score, ref, rtol=1e-5, atol=1e-5), (score, ref)

    # Thresholded (logit-compare) path.
    score_t = jax.block_until_ready(fscore_binary(logits, target, threshold=0.5))
    ref_t = _fscore_ref(logits, target, threshold=0.5)
    assert jnp.allclose(score_t, ref_t, rtol=1e-5, atol=1e-5), (score_t, ref_t)

    # Ragged block count: exercises the in-kernel masked final block (no pad).
    logits2 = jax.random.normal(k3, (1, 1, 40, 128), dtype=jnp.float32)
    target2 = (jax.random.uniform(k4, (1, 1, 40, 128)) > 0.5).astype(jnp.float32)
    score2 = jax.block_until_ready(fscore_binary(logits2, target2, threshold=None))
    ref2 = _fscore_ref(logits2, target2, threshold=None)
    assert jnp.allclose(score2, ref2, rtol=1e-5, atol=1e-5), (score2, ref2)

    # numel not a multiple of 128: exercises the pad fallback + correction.
    logits3 = jax.random.normal(k5, (2, 3, 17, 16), dtype=jnp.float32)
    target3 = (jax.random.uniform(k6, (2, 3, 17, 16)) > 0.5).astype(jnp.float32)
    score3 = jax.block_until_ready(fscore_binary(logits3, target3, threshold=0.3))
    ref3 = _fscore_ref(logits3, target3, threshold=0.3)
    assert jnp.allclose(score3, ref3, rtol=1e-5, atol=1e-5), (score3, ref3)

    print("KERNEL_OK")
</pallas_src>

<mosaic_0001>
module attributes {stable_mosaic.version = 11 : i64} {
  func.func @_fscore_reduce_kernel(%arg0: i32, %arg1: i32, %arg2: memref<4x512xf32, #tpu.memory_space<vmem>>, %arg3: memref<4x512xf32, #tpu.memory_space<vmem>>, %arg4: memref<1x3x4x512xf32, #tpu.memory_space<vmem>>) attributes {dimension_semantics = [#tpu.dimension_semantics<parallel>, #tpu.dimension_semantics<arbitrary>], iteration_bounds = array<i64: 1, 1>, scalar_prefetch = 0 : i64, scratch_operands = 0 : i64, tpu.core_type = #tpu.core_type<tc>, window_params = [{transform_indices = @transform_0, window_bounds = array<i64: 4, 512>}, {transform_indices = @transform_1, window_bounds = array<i64: 4, 512>}, {transform_indices = @transform_2, window_bounds = array<i64: 1, 3, 4, 512>}]} {
    %c0_i32 = arith.constant 0 : i32
    %0 = arith.cmpi eq, %arg1, %c0_i32 : i32
    %1 = arith.extui %0 : i1 to i32
    %c0_i32_0 = arith.constant 0 : i32
    %2 = arith.cmpi ne, %1, %c0_i32_0 : i32
    scf.if %2 {
      %cst = arith.constant 0.000000e+00 : f32
      %13 = vector.broadcast %cst : f32 to vector<1x3x4x512xf32>
      %c0 = arith.constant 0 : index
      %c0_5 = arith.constant 0 : index
      %c0_6 = arith.constant 0 : index
      %c0_7 = arith.constant 0 : index
      %14 = vector.load %arg4[%c0, %c0_5, %c0_6, %c0_7] : memref<1x3x4x512xf32, #tpu.memory_space<vmem>>, vector<1x3x4x512xf32>
      tpu.vector_store %arg4[%c0, %c0_5, %c0_6, %c0_7], %13 {strides = array<i32>} : memref<1x3x4x512xf32, #tpu.memory_space<vmem>>, vector<1x3x4x512xf32>,
    } else {
    }
    %c1_i32 = arith.constant 1 : i32
    %3 = arith.muli %arg0, %c1_i32 : i32
    %4 = arith.addi %3, %arg1 : i32
    %c4_i32 = arith.constant 4 : i32
    %5 = arith.muli %4, %c4_i32 : i32
    %c4_i32_1 = arith.constant 4 : i32
    %6 = arith.addi %5, %c4_i32_1 : i32
    %c4_i32_2 = arith.constant 4 : i32
    %7 = arith.cmpi sle, %6, %c4_i32_2 : i32
    %8 = arith.extui %7 : i1 to i32
    %c0_i32_3 = arith.constant 0 : i32
    %9 = arith.cmpi ne, %8, %c0_i32_3 : i32
    scf.if %9 {
      %cst = arith.constant 0.000000e+00 : f32
      %13 = vector.broadcast %cst : f32 to vector<4x512xf32>
      %c0_i32_5 = arith.constant 0 : i32
      %c4_i32_6 = arith.constant 4 : i32
      %14 = arith.muli %c0_i32_5, %c4_i32_6 : i32
      %15 = tpu.assume_multiple %14, 4 : i32
      %16 = arith.index_cast %15 : i32 to index
      %c0 = arith.constant 0 : index
      %17 = vector.load %arg2[%16, %c0] : memref<4x512xf32, #tpu.memory_space<vmem>>, vector<4x512xf32>
      %18 = arith.index_cast %15 : i32 to index
      %c0_7 = arith.constant 0 : index
      %19 = vector.load %arg3[%18, %c0_7] : memref<4x512xf32, #tpu.memory_space<vmem>>, vector<4x512xf32>
      %cst_8 = arith.constant 5.000000e-01 : f32
      %20 = vector.broadcast %cst_8 : f32 to vector<4x512xf32>
      %21 = arith.mulf %20, %17 : vector<4x512xf32>
      %22 = math.tanh %21 : vector<4x512xf32>
      %cst_9 = arith.constant 5.000000e-01 : f32
      %23 = vector.broadcast %cst_9 : f32 to vector<4x512xf32>
      %24 = arith.mulf %23, %22 : vector<4x512xf32>
      %cst_10 = arith.constant 5.000000e-01 : f32
      %25 = vector.broadcast %cst_10 : f32 to vector<4x512xf32>
      %26 = arith.addf %24, %25 : vector<4x512xf32>
      %27 = arith.mulf %19, %26 : vector<4x512xf32>
      %28 = arith.addf %13, %27 : vector<4x512xf32>
      %29 = arith.addf %13, %26 : vector<4x512xf32>
      %30 = arith.addf %13, %19 : vector<4x512xf32>
      %c1_i32_11 = arith.constant 1 : i32
      %c0_12 = arith.constant 0 : index
      %c0_13 = arith.constant 0 : index
      %c0_14 = arith.constant 0 : index
      %c0_15 = arith.constant 0 : index
      %31 = vector.load %arg4[%c0_12, %c0_13, %c0_14, %c0_15] : memref<1x3x4x512xf32, #tpu.memory_space<vmem>>, vector<1x1x4x512xf32>
      %32 = vector.shape_cast %31 : vector<1x1x4x512xf32> to vector<4x512xf32>
      %33 = arith.addf %32, %28 : vector<4x512xf32>
      %c0_16 = arith.constant 0 : index
      %c0_17 = arith.constant 0 : index
      %c0_18 = arith.constant 0 : index
      %c0_19 = arith.constant 0 : index
      %34 = vector.load %arg4[%c0_16, %c0_17, %c0_18, %c0_19] : memref<1x3x4x512xf32, #tpu.memory_space<vmem>>, vector<1x1x4x512xf32>
      %35 = vector.shape_cast %34 : vector<1x1x4x512xf32> to vector<4x512xf32>
      %36 = vector.shape_cast %33 : vector<4x512xf32> to vector<1x1x4x512xf32>
      tpu.vector_store %arg4[%c0_16, %c0_17, %c0_18, %c0_19], %36 {strides = array<i32>} : memref<1x3x4x512xf32, #tpu.memory_space<vmem>>, vector<1x1x4x512xf32>,
      %c0_20 = arith.constant 0 : index
      %c1 = arith.constant 1 : index
      %c0_21 = arith.constant 0 : index
      %c0_22 = arith.constant 0 : index
      %37 = vector.load %arg4[%c0_20, %c1, %c0_21, %c0_22] : memref<1x3x4x512xf32, #tpu.memory_space<vmem>>, vector<1x1x4x512xf32>
      %38 = vector.shape_cast %37 : vector<1x1x4x512xf32> to vector<4x512xf32>
      %39 = arith.addf %38, %29 : vector<4x512xf32>
      %c0_23 = arith.constant 0 : index
      %c1_24 = arith.constant 1 : index
      %c0_25 = arith.constant 0 : index
      %c0_26 = arith.constant 0 : index
      %40 = vector.load %arg4[%c0_23, %c1_24, %c0_25, %c0_26] : memref<1x3x4x512xf32, #tpu.memory_space<vmem>>, vector<1x1x4x512xf32>
      %41 = vector.shape_cast %40 : vector<1x1x4x512xf32> to vector<4x512xf32>
      %42 = vector.shape_cast %39 : vector<4x512xf32> to vector<1x1x4x512xf32>
      tpu.vector_store %arg4[%c0_23, %c1_24, %c0_25, %c0_26], %42 {strides = array<i32>} : memref<1x3x4x512xf32, #tpu.memory_space<vmem>>, vector<1x1x4x512xf32>,
      %c0_27 = arith.constant 0 : index
      %c2 = arith.constant 2 : index
      %c0_28 = arith.constant 0 : index
      %c0_29 = arith.constant 0 : index
      %43 = vector.load %arg4[%c0_27, %c2, %c0_28, %c0_29] : memref<1x3x4x512xf32, #tpu.memory_space<vmem>>, vector<1x1x4x512xf32>
      %44 = vector.shape_cast %43 : vector<1x1x4x512xf32> to vector<4x512xf32>
      %45 = arith.addf %44, %30 : vector<4x512xf32>
      %c0_30 = arith.constant 0 : index
      %c2_31 = arith.constant 2 : index
      %c0_32 = arith.constant 0 : index
      %c0_33 = arith.constant 0 : index
      %46 = vector.load %arg4[%c0_30, %c2_31, %c0_32, %c0_33] : memref<1x3x4x512xf32, #tpu.memory_space<vmem>>, vector<1x1x4x512xf32>
      %47 = vector.shape_cast %46 : vector<1x1x4x512xf32> to vector<4x512xf32>
      %48 = vector.shape_cast %45 : vector<4x512xf32> to vector<1x1x4x512xf32>
      tpu.vector_store %arg4[%c0_30, %c2_31, %c0_32, %c0_33], %48 {strides = array<i32>} : memref<1x3x4x512xf32, #tpu.memory_space<vmem>>, vector<1x1x4x512xf32>,
    } else {
    }
    %true = arith.constant true
    %10 = arith.xori %7, %true : i1
    %11 = arith.extui %10 : i1 to i32
    %c0_i32_4 = arith.constant 0 : i32
    %12 = arith.cmpi ne, %11, %c0_i32_4 : i32
    scf.if %12 {
      %cst = arith.constant 0.000000e+00 : f32
      %13 = vector.broadcast %cst : f32 to vector<4x512xf32>
      %c0_i32_5 = arith.constant 0 : i32
      %c4_i32_6 = arith.constant 4 : i32
      %14 = arith.muli %c0_i32_5, %c4_i32_6 : i32
      %15 = tpu.assume_multiple %14, 4 : i32
      %16 = arith.index_cast %15 : i32 to index
      %c0 = arith.constant 0 : index
      %17 = vector.load %arg2[%16, %c0] : memref<4x512xf32, #tpu.memory_space<vmem>>, vector<4x512xf32>
      %18 = arith.index_cast %15 : i32 to index
      %c0_7 = arith.constant 0 : index
      %19 = vector.load %arg3[%18, %c0_7] : memref<4x512xf32, #tpu.memory_space<vmem>>, vector<4x512xf32>
      %c4_i32_8 = arith.constant 4 : i32
      %20 = arith.muli %c0_i32_5, %c4_i32_8 : i32
      %21 = arith.addi %5, %20 : i32
      %c4_i32_9 = arith.constant 4 : i32
      %22 = arith.subi %c4_i32_9, %21 : i32
      %23 = tpu.iota {dimensions = array<i32: 0>} : vector<4x512xi32>
      %24 = vector.broadcast %22 : i32 to vector<4x512xi32>
      %25 = arith.cmpi slt, %23, %24 : vector<4x512xi32>
      %cst_10 = arith.constant 0.000000e+00 : f32
      %26 = vector.broadcast %cst_10 : f32 to vector<4x512xf32>
      %27 = arith.select %25, %17, %26 : vector<4x512xi1>, vector<4x512xf32>
      %cst_11 = arith.constant 0.000000e+00 : f32
      %28 = vector.broadcast %cst_11 : f32 to vector<4x512xf32>
      %29 = arith.select %25, %19, %28 : vector<4x512xi1>, vector<4x512xf32>
      %cst_12 = arith.constant 5.000000e-01 : f32
      %30 = vector.broadcast %cst_12 : f32 to vector<4x512xf32>
      %31 = arith.mulf %30, %27 : vector<4x512xf32>
      %32 = math.tanh %31 : vector<4x512xf32>
      %cst_13 = arith.constant 5.000000e-01 : f32
      %33 = vector.broadcast %cst_13 : f32 to vector<4x512xf32>
      %34 = arith.mulf %33, %32 : vector<4x512xf32>
      %cst_14 = arith.constant 5.000000e-01 : f32
      %35 = vector.broadcast %cst_14 : f32 to vector<4x512xf32>
      %36 = arith.addf %34, %35 : vector<4x512xf32>
      %37 = arith.mulf %29, %36 : vector<4x512xf32>
      %cst_15 = arith.constant 0.000000e+00 : f32
      %38 = vector.broadcast %cst_15 : f32 to vector<4x512xf32>
      %39 = arith.select %25, %36, %38 : vector<4x512xi1>, vector<4x512xf32>
      %40 = arith.addf %13, %37 : vector<4x512xf32>
      %41 = arith.addf %13, %39 : vector<4x512xf32>
      %42 = arith.addf %13, %29 : vector<4x512xf32>
      %c1_i32_16 = arith.constant 1 : i32
      %c0_17 = arith.constant 0 : index
      %c0_18 = arith.constant 0 : index
      %c0_19 = arith.constant 0 : index
      %c0_20 = arith.constant 0 : index
      %43 = vector.load %arg4[%c0_17, %c0_18, %c0_19, %c0_20] : memref<1x3x4x512xf32, #tpu.memory_space<vmem>>, vector<1x1x4x512xf32>
      %44 = vector.shape_cast %43 : vector<1x1x4x512xf32> to vector<4x512xf32>
      %45 = arith.addf %44, %40 : vector<4x512xf32>
      %c0_21 = arith.constant 0 : index
      %c0_22 = arith.constant 0 : index
      %c0_23 = arith.constant 0 : index
      %c0_24 = arith.constant 0 : index
      %46 = vector.load %arg4[%c0_21, %c0_22, %c0_23, %c0_24] : memref<1x3x4x512xf32, #tpu.memory_space<vmem>>, vector<1x1x4x512xf32>
      %47 = vector.shape_cast %46 : vector<1x1x4x512xf32> to vector<4x512xf32>
      %48 = vector.shape_cast %45 : vector<4x512xf32> to vector<1x1x4x512xf32>
      tpu.vector_store %arg4[%c0_21, %c0_22, %c0_23, %c0_24], %48 {strides = array<i32>} : memref<1x3x4x512xf32, #tpu.memory_space<vmem>>, vector<1x1x4x512xf32>,
      %c0_25 = arith.constant 0 : index
      %c1 = arith.constant 1 : index
      %c0_26 = arith.constant 0 : index
      %c0_27 = arith.constant 0 : index
      %49 = vector.load %arg4[%c0_25, %c1, %c0_26, %c0_27] : memref<1x3x4x512xf32, #tpu.memory_space<vmem>>, vector<1x1x4x512xf32>
      %50 = vector.shape_cast %49 : vector<1x1x4x512xf32> to vector<4x512xf32>
      %51 = arith.addf %50, %41 : vector<4x512xf32>
      %c0_28 = arith.constant 0 : index
      %c1_29 = arith.constant 1 : index
      %c0_30 = arith.constant 0 : index
      %c0_31 = arith.constant 0 : index
      %52 = vector.load %arg4[%c0_28, %c1_29, %c0_30, %c0_31] : memref<1x3x4x512xf32, #tpu.memory_space<vmem>>, vector<1x1x4x512xf32>
      %53 = vector.shape_cast %52 : vector<1x1x4x512xf32> to vector<4x512xf32>
      %54 = vector.shape_cast %51 : vector<4x512xf32> to vector<1x1x4x512xf32>
      tpu.vector_store %arg4[%c0_28, %c1_29, %c0_30, %c0_31], %54 {strides = array<i32>} : memref<1x3x4x512xf32, #tpu.memory_space<vmem>>, vector<1x1x4x512xf32>,
      %c0_32 = arith.constant 0 : index
      %c2 = arith.constant 2 : index
      %c0_33 = arith.constant 0 : index
      %c0_34 = arith.constant 0 : index
      %55 = vector.load %arg4[%c0_32, %c2, %c0_33, %c0_34] : memref<1x3x4x512xf32, #tpu.memory_space<vmem>>, vector<1x1x4x512xf32>
      %56 = vector.shape_cast %55 : vector<1x1x4x512xf32> to vector<4x512xf32>
      %57 = arith.addf %56, %42 : vector<4x512xf32>
      %c0_35 = arith.constant 0 : index
      %c2_36 = arith.constant 2 : index
      %c0_37 = arith.constant 0 : index
      %c0_38 = arith.constant 0 : index
      %58 = vector.load %arg4[%c0_35, %c2_36, %c0_37, %c0_38] : memref<1x3x4x512xf32, #tpu.memory_space<vmem>>, vector<1x1x4x512xf32>
      %59 = vector.shape_cast %58 : vector<1x1x4x512xf32> to vector<4x512xf32>
      %60 = vector.shape_cast %57 : vector<4x512xf32> to vector<1x1x4x512xf32>
      tpu.vector_store %arg4[%c0_35, %c2_36, %c0_37, %c0_38], %60 {strides = array<i32>} : memref<1x3x4x512xf32, #tpu.memory_space<vmem>>, vector<1x1x4x512xf32>,
    } else {
    }
    return
  }
  func.func @transform_0(%arg0: i32, %arg1: i32) -> (i32, i32) {
    %c1_i32 = arith.constant 1 : i32
    %0 = arith.muli %arg0, %c1_i32 : i32
    %1 = arith.addi %0, %arg1 : i32
    %c0_i32 = arith.constant 0 : i32
    %2 = arith.minsi %1, %c0_i32 : i32
    %c0_i32_0 = arith.constant 0 : i32
    %c0_i32_1 = arith.constant 0 : i32
    return %2, %c0_i32_0 : i32, i32
  }
  func.func @transform_1(%arg0: i32, %arg1: i32) -> (i32, i32) {
    %c1_i32 = arith.constant 1 : i32
    %0 = arith.muli %arg0, %c1_i32 : i32
    %1 = arith.addi %0, %arg1 : i32
    %c0_i32 = arith.constant 0 : i32
    %2 = arith.minsi %1, %c0_i32 : i32
    %c0_i32_0 = arith.constant 0 : i32
    %c0_i32_1 = arith.constant 0 : i32
    return %2, %c0_i32_0 : i32, i32
  }
  func.func @transform_2(%arg0: i32, %arg1: i32) -> (i32, i32, i32, i32) {
    %c0_i32 = arith.constant 0 : i32
    %c0_i32_0 = arith.constant 0 : i32
    %c0_i32_1 = arith.constant 0 : i32
    %c0_i32_2 = arith.constant 0 : i32
    return %arg0, %c0_i32, %c0_i32_0, %c0_i32_1 : i32, i32, i32, i32
  }
}

</mosaic_0001>

<llo_original>
// kernel: tpu_custom_call.1
$region0: #{tpu_custom_call.1}
  #allocation0 [shape = 'u32[]', space=smem, size = 0x4, offset = 0x4, fixed_abs, tag = 'smem constant byte address 0x4 - core index']
  #allocation1 [shape = 'u32[144,128]{1,0:T(1,128)}', space=vmem, size = 0x12000, scoped, tag = 'internal scratch']
  %s0 = inlined_call_operand.hbm [shape: f32[4,512], index: 0, kind: input, shape index: {}]
  %s1 = inlined_call_operand.hbm [shape: f32[4,512], index: 1, kind: input, shape index: {}]
  %s2 = inlined_call_operand.hbm [shape: f32[1,3,4,512], index: 2, kind: output, shape index: {}]
  %s3 = sld [smem:[#allocation0]]
  $region38: #{tpu_custom_call.1} parent=0
    _
  %s5 = ssub.s32 1, %s3
  %s6 = scalar_select 0, %s5, %s3
  $region1: #{tpu_custom_call.1} parent=0
    #allocation2 [shape = 'u8[8192]{0}', space=vmem, size = 0x2000, scoped, tag = 'input window, operand 0, single buffered']
    #allocation3 [shape = 's32[1]{0}', space=sflag, size = 0x4, scoped, tag = 'scoped memory for tpu_custom_call.1']
    #allocation4 [shape = 's32[1]{0}', space=sflag, size = 0x4, scoped, tag = 'scoped memory for tpu_custom_call.1']
    #allocation5 [shape = 'u8[8192]{0}', space=vmem, size = 0x2000, scoped, tag = 'input window, operand 1, single buffered']
    #allocation6 [shape = 's32[1]{0}', space=sflag, size = 0x4, scoped, tag = 'scoped memory for tpu_custom_call.1']
    #allocation7 [shape = 'u8[24576]{0}', space=vmem, size = 0x6000, scoped, tag = 'output window, operand 0, single buffered']
    %7 = vsyncpa [#allocation3], 0
    %8 = vsyncpa [#allocation6], 0
    %9 = vsyncpa [#allocation4], 0
    // Predicated region
    $region2: #{tpu_custom_call.1} parent=1 // pred_check
      _
    $region3: #{tpu_custom_call.1} parent=1 // pred_check_branch
      %11 = sbr.rel (0) target = $region5
    $region4: #{tpu_custom_call.1} parent=1 // pred_region
      %s12 = sadd.s32 0, 0
      %p13 = scmp.lt.s32.totalorder %s12, 0
      %s14 = scalar_select %p13, %s12, 0
      %s16 = ssub.s32 256, 256
      %17 = vsyncadd [#allocation3], %s16
      %s18 = smul.addr %s14, 4
      %s19 = smul.addr %s18, 64
      %s20 = scalar_lea.hbm %s0, %s19
      %s22 = sshll.u32 [#allocation2], 4
      %s23 = int_to_ptr.vmem [resolvable:$true] %s22
      %25 = dma.hbm_to_vmem [thread:$0]  %s20, 256, %s23, [#allocation3]
    $region5: #{tpu_custom_call.1} parent=1 // pred_fallthru
      _
    // Predicated region
    $region6: #{tpu_custom_call.1} parent=1 // pred_check
      _
    $region7: #{tpu_custom_call.1} parent=1 // pred_check_branch
      %27 = sbr.rel (0) target = $region9
    $region8: #{tpu_custom_call.1} parent=1 // pred_region
      %s28 = sadd.s32 0, 0
      %p29 = scmp.lt.s32.totalorder %s28, 0
      %s30 = scalar_select %p29, %s28, 0
      %s32 = ssub.s32 256, 256
      %33 = vsyncadd [#allocation6], %s32
      %s34 = smul.addr %s30, 4
      %s35 = smul.addr %s34, 64
      %s36 = scalar_lea.hbm %s1, %s35
      %s38 = sshll.u32 [#allocation5], 4
      %s39 = int_to_ptr.vmem [resolvable:$true] %s38
      %41 = dma.hbm_to_vmem [thread:$0]  %s36, 256, %s39, [#allocation6]
    $region9: #{tpu_custom_call.1} parent=1 // pred_fallthru
      _
    // Predicated region
    $region10: #{tpu_custom_call.1} parent=1 // pred_check
      _
    $region11: #{tpu_custom_call.1} parent=1 // pred_check_branch
      %43 = sbr.rel (0) target = $region13
    $region12: #{tpu_custom_call.1} parent=1 // pred_region
      %44 = dma.done [#allocation3], 256
    $region13: #{tpu_custom_call.1} parent=1 // pred_fallthru
      _
    // Predicated region
    $region14: #{tpu_custom_call.1} parent=1 // pred_check
      _
    $region15: #{tpu_custom_call.1} parent=1 // pred_check_branch
      %46 = sbr.rel (0) target = $region17
    $region16: #{tpu_custom_call.1} parent=1 // pred_region
      %47 = dma.done [#allocation6], 256
    $region17: #{tpu_custom_call.1} parent=1 // pred_fallthru
      _
    %s48 = sadd.s32 0, 0
    %p49 = scmp.lt.s32.totalorder %s48, 0
    %s50 = scalar_select %p49, %s48, 0
    %s51 = sadd.s32 0, 0
    %p52 = scmp.lt.s32.totalorder %s51, 0
    %s53 = scalar_select %p52, %s51, 0
    %p54 = scmp.eq.s32.totalorder 0, 0
    // Predicated region
    $region18: #{tpu_custom_call.1} parent=1 // pred_check
      %p55 = pneg %p54
    $region19: #{tpu_custom_call.1} parent=1 // pred_check_branch
      %57 = sbr.rel (%p55) target = $region21
    $region20: #{tpu_custom_call.1} parent=1 // pred_region
      %58 = vst [vmem:[#allocation7] sm:$0xff] 0.0
      %59 = vst [vmem:[#allocation7 + $0x8] sm:$0xff] 0.0
      %60 = vst [vmem:[#allocation7 + $0x10] sm:$0xff] 0.0
      %61 = vst [vmem:[#allocation7 + $0x18] sm:$0xff] 0.0
      %62 = vst [vmem:[#allocation7 + $0x20] sm:$0xff] 0.0
      %63 = vst [vmem:[#allocation7 + $0x28] sm:$0xff] 0.0
    $region21: #{tpu_custom_call.1} parent=1 // pred_fallthru
      _
    %s64 = sadd.s32 0, 0
    %s65 = smul.u32 %s64, 4
    %s66 = sadd.s32 %s65, 4
    %p67 = scmp.le.s32.totalorder %s66, 4
    // Predicated region
    $region22: #{tpu_custom_call.1} parent=1 // pred_check
      %p68 = pneg %p67
    $region23: #{tpu_custom_call.1} parent=1 // pred_check_branch
      %70 = sbr.rel (%p68) target = $region25
    $region24: #{tpu_custom_call.1} parent=1 // pred_region
      %s71 = smul.u32 0, 4
      %s72 = smul.addr %s71, 4
      %s73 = scalar_lea.vmem [#allocation2], %s72
      %v74 = vld [vmem:[%s73] sm:$0xff]
      %v75 = vld [vmem:[%s73 + $0x8] sm:$0xff]
      %s76 = smul.addr %s71, 4
      %s77 = scalar_lea.vmem [#allocation5], %s76
      %v78 = vld [vmem:[%s77] sm:$0xff]
      %v79 = vld [vmem:[%s77 + $0x8] sm:$0xff]
      %v80 = vmul.f32 %v74, 0.5
      %v81 = vmul.f32 %v75, 0.5
      %v82 = vtanh.pop %v80
      %v83 = vtanh.pop %v81
      %v84 = vmul.f32 %v82, 0.5
      %v85 = vmul.f32 %v83, 0.5
      %v86 = vadd.f32 %v84, 0.5
      %v87 = vadd.f32 %v85, 0.5
      %v88 = vmul.f32 %v78, %v86
      %v89 = vmul.f32 %v79, %v87
      %v90 = vadd.f32 %v88, 0.0
      %v91 = vadd.f32 %v89, 0.0
      %v92 = vadd.f32 %v86, 0.0
      %v93 = vadd.f32 %v87, 0.0
      %v94 = vadd.f32 %v78, 0.0
      %v95 = vadd.f32 %v79, 0.0
      %v96 = vld [vmem:[#allocation7] sm:$0xff]
      %v97 = vld [vmem:[#allocation7 + $0x8] sm:$0xff]
      %v98 = vadd.f32 %v96, %v90
      %v99 = vadd.f32 %v97, %v91
      %100 = vst [vmem:[#allocation7] sm:$0xff] %v98
      %101 = vst [vmem:[#allocation7 + $0x8] sm:$0xff] %v99
      %s102 = scalar_lea.vmem [#allocation7], 16
      %v103 = vld [vmem:[%s102] sm:$0xff]
      %v104 = vld [vmem:[%s102 + $0x8] sm:$0xff]
      %v105 = vadd.f32 %v103, %v92
      %v106 = vadd.f32 %v104, %v93
      %107 = vst [vmem:[%s102] sm:$0xff] %v105
      %108 = vst [vmem:[%s102 + $0x8] sm:$0xff] %v106
      %s109 = scalar_lea.vmem [#allocation7], 32
      %v110 = vld [vmem:[%s109] sm:$0xff]
      %v111 = vld [vmem:[%s109 + $0x8] sm:$0xff]
      %v112 = vadd.f32 %v110, %v94
      %v113 = vadd.f32 %v111, %v95
      %114 = vst [vmem:[%s109] sm:$0xff] %v112
      %115 = vst [vmem:[%s109 + $0x8] sm:$0xff] %v113
    $region25: #{tpu_custom_call.1} parent=1 // pred_fallthru
      _
    %p116 = scmp.gt.s32.totalorder %s66, 4
    // Predicated region
    $region26: #{tpu_custom_call.1} parent=1 // pred_check
      %p117 = pneg %p116
    $region27: #{tpu_custom_call.1} parent=1 // pred_check_branch
      %119 = sbr.rel (%p117) target = $region29
    $region28: #{tpu_custom_call.1} parent=1 // pred_region
      %s120 = smul.u32 0, 4
      %s121 = smul.addr %s120, 4
      %s122 = scalar_lea.vmem [#allocation2], %s121
      %v123 = vld [vmem:[%s122] sm:$0xff]
      %v124 = vld [vmem:[%s122 + $0x8] sm:$0xff]
      %s125 = smul.addr %s120, 4
      %s126 = scalar_lea.vmem [#allocation5], %s125
      %v127 = vld [vmem:[%s126] sm:$0xff]
      %v128 = vld [vmem:[%s126 + $0x8] sm:$0xff]
      %s129 = ssub.s32 4, %s65
      %v130 = vlaneseq
      %v131 = vshrl.u32 %v130, 7
      %v132 = vstv %s129
      %vm133 = vcmp.lt.s32.totalorder %v131, %v132
      %v136 = vcombine.high %v123, %v123
      %v137 = vcombine.high %v124, %v124
      %v140 = vsel %vm133, %v123, 0.0
      %v141 = vsel %vm133, %v136, 0.0
      %v142 = vsel %vm133, %v124, 0.0
      %v143 = vsel %vm133, %v137, 0.0
      %v146 = vcombine.high %v127, %v127
      %v147 = vcombine.high %v128, %v128
      %v150 = vsel %vm133, %v127, 0.0
      %v151 = vsel %vm133, %v146, 0.0
      %v152 = vsel %vm133, %v128, 0.0
      %v153 = vsel %vm133, %v147, 0.0
      %v154 = vmul.f32 %v140, 0.5
      %v155 = vmul.f32 %v141, 0.5
      %v156 = vmul.f32 %v142, 0.5
      %v157 = vmul.f32 %v143, 0.5
      %v158 = vtanh.pop %v154
      %v159 = vtanh.pop %v155
      %v160 = vtanh.pop %v156
      %v161 = vtanh.pop %v157
      %v162 = vmul.f32 %v158, 0.5
      %v163 = vmul.f32 %v159, 0.5
      %v164 = vmul.f32 %v160, 0.5
      %v165 = vmul.f32 %v161, 0.5
      %v166 = vadd.f32 %v162, 0.5
      %v167 = vadd.f32 %v163, 0.5
      %v168 = vadd.f32 %v164, 0.5
      %v169 = vadd.f32 %v165, 0.5
      %v170 = vmul.f32 %v150, %v166
      %v171 = vmul.f32 %v151, %v167
      %v172 = vmul.f32 %v152, %v168
      %v173 = vmul.f32 %v153, %v169
      %v174 = vsel %vm133, %v166, 0.0
      %v175 = vsel %vm133, %v167, 0.0
      %v176 = vsel %vm133, %v168, 0.0
      %v177 = vsel %vm133, %v169, 0.0
      %v178 = vadd.f32 %v170, 0.0
      %v179 = vadd.f32 %v171, 0.0
      %v180 = vadd.f32 %v172, 0.0
      %v181 = vadd.f32 %v173, 0.0
      %v182 = vadd.f32 %v174, 0.0
      %v183 = vadd.f32 %v175, 0.0
      %v184 = vadd.f32 %v176, 0.0
      %v185 = vadd.f32 %v177, 0.0
      %v186 = vadd.f32 %v150, 0.0
      %v187 = vadd.f32 %v151, 0.0
      %v188 = vadd.f32 %v152, 0.0
      %v189 = vadd.f32 %v153, 0.0
      %v190 = vld [vmem:[#allocation7] sm:$0xff]
      %v191 = vld [vmem:[#allocation7 + $0x8] sm:$0xff]
      %v196 = vcombine.low %v178, %v179
      %v197 = vcombine.low %v180, %v181
      %v200 = vadd.f32 %v190, %v196
      %v201 = vadd.f32 %v191, %v197
      %202 = vst [vmem:[#allocation7] sm:$0xff] %v200
      %203 = vst [vmem:[#allocation7 + $0x8] sm:$0xff] %v201
      %s204 = scalar_lea.vmem [#allocation7], 16
      %v205 = vld [vmem:[%s204] sm:$0xff]
      %v206 = vld [vmem:[%s204 + $0x8] sm:$0xff]
      %v211 = vcombine.low %v182, %v183
      %v212 = vcombine.low %v184, %v185
      %v215 = vadd.f32 %v205, %v211
      %v216 = vadd.f32 %v206, %v212
      %217 = vst [vmem:[%s204] sm:$0xff] %v215
      %218 = vst [vmem:[%s204 + $0x8] sm:$0xff] %v216
      %s219 = scalar_lea.vmem [#allocation7], 32
      %v220 = vld [vmem:[%s219] sm:$0xff]
      %v221 = vld [vmem:[%s219 + $0x8] sm:$0xff]
      %v226 = vcombine.low %v186, %v187
      %v227 = vcombine.low %v188, %v189
      %v230 = vadd.f32 %v220, %v226
      %v231 = vadd.f32 %v221, %v227
      %232 = vst [vmem:[%s219] sm:$0xff] %v230
      %233 = vst [vmem:[%s219 + $0x8] sm:$0xff] %v231
    $region29: #{tpu_custom_call.1} parent=1 // pred_fallthru
      _
    // Predicated region
    $region30: #{tpu_custom_call.1} parent=1 // pred_check
      _
    $region31: #{tpu_custom_call.1} parent=1 // pred_check_branch
      %235 = sbr.rel (0) target = $region33
    $region32: #{tpu_custom_call.1} parent=1 // pred_region
      %s237 = ssub.s32 768, 768
      %238 = vsyncadd [#allocation4], %s237
      %s239 = sshll.u32 [#allocation7], 4
      %s240 = int_to_ptr.vmem [resolvable:$true] %s239
      %245 = dma.vmem_to_hbm [thread:$0]  %s240, 768, %s2, [#allocation4], 256, 256, 16
    $region33: #{tpu_custom_call.1} parent=1 // pred_fallthru
      _
    // Predicated region
    $region34: #{tpu_custom_call.1} parent=1 // pred_check
      _
    $region35: #{tpu_custom_call.1} parent=1 // pred_check_branch
      %247 = sbr.rel (0) target = $region37
    $region36: #{tpu_custom_call.1} parent=1 // pred_region
      %248 = dma.done [#allocation4], 768
    $region37: #{tpu_custom_call.1} parent=1 // pred_fallthru
      _
    %249 = vsyncpa [#allocation3], 1
    %250 = vsyncpa [#allocation6], 1
    %251 = vsyncpa [#allocation4], 1

</llo_original>
